<compile_context>
chip_gen: v6e
topology: v6e:2x2x1
jax: 0.10.0
libtpu: 0.0.40
codegen_flags: <defaults>
</compile_context>

<pallas_src>
import jax
import jax.numpy as jnp
from jax.experimental import pallas as pl
from jax.experimental.pallas import tpu as pltpu

IN_CH = 3                 # RGB input
TRI_CH = 3                # trimap channels (bg, fg, unsure)
T_HID = 32                # hidden width of the T-net stand-in
M_HID = 32                # hidden width of the M-net stand-in
M_IN = IN_CH + TRI_CH     # 6 channels fed to the M-net stand-in


def _round_up(n, m):
    return (n + m - 1) // m * m


def _shm_kernel(x_ref,
                tw1_ref, tb1_ref, tw2_ref, tb2_ref,
                mw1_ref, mb1_ref, mw2_ref, mb2_ref,
                trimap_ref, alpha_ref):
    tile = x_ref.shape[-1]
    x = x_ref[0].astype(jnp.float32)          # (IN_CH, tile), pixels on lanes

    tw1 = tw1_ref[...]                        # (T_HID, IN_CH)
    tb1 = tb1_ref[...]                        # (T_HID, 1)
    tw2 = tw2_ref[...]                        # (T_HID, TRI_CH)
    tb2 = tb2_ref[...]                        # (TRI_CH, 1)
    mw1 = mw1_ref[...]                        # (M_HID, M_IN)
    mb1 = mb1_ref[...]                        # (M_HID, 1)
    mw2 = mw2_ref[...]                        # (M_HID, 1)
    mb2 = mb2_ref[...]                        # (1, 1)

    # ---- T-net stand-in layer 1: 1x1 conv 3 -> T_HID as unrolled VPU FMAs ----
    h = jnp.broadcast_to(tb1, (T_HID, tile))
    for k in range(IN_CH):
        h = h + tw1[:, k:k + 1] * x[k:k + 1, :]
    h = jnp.maximum(h, 0.0)

    # ---- T-net layer 2: T_HID -> 3 via weighted cross-sublane reductions ----
    t_chans = []
    for c in range(TRI_CH):
        tc = jnp.sum(tw2[:, c:c + 1] * h, axis=0, keepdims=True) + tb2[c:c + 1, :]
        t_chans.append(tc)                                   # each (1, tile)
    trimap = jnp.concatenate(t_chans, axis=0)                # (3, tile)
    trimap_ref[0] = trimap.astype(trimap_ref.dtype)          # lane-dense store

    # ---- softmax over the 3 trimap channels (channel-major: pure VPU/EUP) ----
    t0, t1, t2 = t_chans
    t_max = jnp.maximum(jnp.maximum(t0, t1), t2)
    e0 = jnp.exp(t0 - t_max)
    e1 = jnp.exp(t1 - t_max)
    e2 = jnp.exp(t2 - t_max)
    inv = pl.reciprocal(e0 + e1 + e2, approx=True)
    bg = e0 * inv
    fg = e1 * inv
    un = e2 * inv

    # ---- M-net stand-in layer 1 on concat(input, trimap_softmax): 6 -> M_HID ----
    m_chans = (x[0:1, :], x[1:2, :], x[2:3, :], bg, fg, un)
    hm = jnp.broadcast_to(mb1, (M_HID, tile))
    for k in range(M_IN):
        hm = hm + mw1[:, k:k + 1] * m_chans[k]
    hm = jnp.maximum(hm, 0.0)

    # ---- M-net layer 2: M_HID -> 1 ----
    alpha_r = jnp.sum(mw2 * hm, axis=0, keepdims=True) + mb2  # (1, tile)

    # ---- SHM fusion: alpha_p = fg + unsure * alpha_r ----
    alpha_p = fg + un * alpha_r
    alpha_ref[0] = alpha_p.astype(alpha_ref.dtype)            # lane-dense store


def shm_net_forward(x_nchw, params, *, tile_hw=8192):
    """x_nchw: (B, 3, H, W) f32. Returns (trimap (B,3,H,W), alpha_p (B,1,H,W))."""
    B, C, H, W = x_nchw.shape
    assert C == IN_CH
    HW = H * W

    # Pick a lane-dense tile (multiple of 128) and pad the pixel axis so the
    # grid covers any H*W (no divisibility requirement).
    tile = min(tile_hw, _round_up(HW, 128))
    HW_pad = _round_up(HW, tile)

    x_flat = x_nchw.reshape(B, C, HW)                 # free reshape (NCHW-contiguous)
    if HW_pad != HW:
        x_flat = jnp.pad(x_flat, ((0, 0), (0, 0), (0, HW_pad - HW)))

    (tw1, tb1, tw2, tb2, mw1, mb1, mw2, mb2) = params

    def w_spec(arr):
        # Tiny weights: full-array VMEM block, constant index map (resident).
        return pl.BlockSpec(arr.shape, lambda b, i: (0, 0))

    grid = (B, HW_pad // tile)

    trimap_flat, alpha_flat = pl.pallas_call(
        _shm_kernel,
        out_shape=(
            jax.ShapeDtypeStruct((B, TRI_CH, HW_pad), jnp.float32),
            jax.ShapeDtypeStruct((B, 1, HW_pad), jnp.float32),
        ),
        grid_spec=pltpu.PrefetchScalarGridSpec(
            num_scalar_prefetch=0,
            grid=grid,
            in_specs=[
                pl.BlockSpec((1, IN_CH, tile), lambda b, i: (b, 0, i)),
                w_spec(tw1), w_spec(tb1), w_spec(tw2), w_spec(tb2),
                w_spec(mw1), w_spec(mb1), w_spec(mw2), w_spec(mb2),
            ],
            out_specs=[
                pl.BlockSpec((1, TRI_CH, tile), lambda b, i: (b, 0, i)),
                pl.BlockSpec((1, 1, tile), lambda b, i: (b, 0, i)),
            ],
        ),
        compiler_params=pltpu.CompilerParams(
            dimension_semantics=("parallel", "parallel")),
    )(x_flat, tw1, tb1, tw2, tb2, mw1, mb1, mw2, mb2)

    trimap = trimap_flat[:, :, :HW].reshape(B, TRI_CH, H, W)
    alpha_p = alpha_flat[:, :, :HW].reshape(B, 1, H, W)
    return trimap, alpha_p


def init_params(key):
    """Weights stored channel-major-friendly: (out, in) and (out, 1) biases."""
    ks = jax.random.split(key, 8)
    scale = 0.1
    tw1 = scale * jax.random.normal(ks[0], (T_HID, IN_CH), jnp.float32)
    tb1 = scale * jax.random.normal(ks[1], (T_HID, 1), jnp.float32)
    tw2 = scale * jax.random.normal(ks[2], (T_HID, TRI_CH), jnp.float32)
    tb2 = scale * jax.random.normal(ks[3], (TRI_CH, 1), jnp.float32)
    mw1 = scale * jax.random.normal(ks[4], (M_HID, M_IN), jnp.float32)
    mb1 = scale * jax.random.normal(ks[5], (M_HID, 1), jnp.float32)
    mw2 = scale * jax.random.normal(ks[6], (M_HID, 1), jnp.float32)
    mb2 = scale * jax.random.normal(ks[7], (1, 1), jnp.float32)
    return (tw1, tb1, tw2, tb2, mw1, mb1, mw2, mb2)


def _reference(x_nchw, params):
    """Pure-JAX reference of the same forward for a sanity check."""
    tw1, tb1, tw2, tb2, mw1, mb1, mw2, mb2 = params
    B, C, H, W = x_nchw.shape
    x = jnp.transpose(x_nchw, (0, 2, 3, 1)).reshape(-1, C)          # (P, 3)
    trimap = jnp.maximum(x @ tw1.T + tb1[:, 0], 0.0) @ tw2 + tb2[:, 0]
    sm = jax.nn.softmax(trimap, axis=-1)
    fg, unsure = sm[:, 1:2], sm[:, 2:3]
    m_in = jnp.concatenate([x, sm], axis=-1)                        # (P, 6)
    alpha_r = jnp.maximum(m_in @ mw1.T + mb1[:, 0], 0.0) @ mw2 + mb2[:, 0]
    alpha_p = fg + unsure * alpha_r
    trimap = jnp.transpose(trimap.reshape(B, H, W, TRI_CH), (0, 3, 1, 2))
    alpha_p = jnp.transpose(alpha_p.reshape(B, H, W, 1), (0, 3, 1, 2))
    return trimap, alpha_p


if __name__ == "__main__":
    key = jax.random.PRNGKey(0)
    k_x, k_p = jax.random.split(key)

    B, H, W = 2, 16, 16
    x = jax.random.normal(k_x, (B, IN_CH, H, W), jnp.float32)
    params = init_params(k_p)

    trimap, alpha_p = jax.jit(shm_net_forward)(x, params)
    jax.block_until_ready((trimap, alpha_p))

    # correctness check against pure-JAX reference
    trimap_ref, alpha_ref = _reference(x, params)
    assert trimap.shape == (B, TRI_CH, H, W)
    assert alpha_p.shape == (B, 1, H, W)
    # trimap path is exact FMA math; alpha path uses approx reciprocal (EUP),
    # so its tolerance is loosened accordingly.
    assert jnp.allclose(trimap, trimap_ref, atol=1e-4, rtol=1e-4)
    assert jnp.allclose(alpha_p, alpha_ref, atol=3e-3, rtol=3e-3)

    print("KERNEL_OK")
</pallas_src>

<mosaic_0001>
module attributes {stable_mosaic.version = 11 : i64} {
  func.func @_shm_kernel(%arg0: i32, %arg1: i32, %arg2: memref<1x3x256xf32, #tpu.memory_space<vmem>>, %arg3: memref<32x3xf32, #tpu.memory_space<vmem>>, %arg4: memref<32x1xf32, #tpu.memory_space<vmem>>, %arg5: memref<32x3xf32, #tpu.memory_space<vmem>>, %arg6: memref<3x1xf32, #tpu.memory_space<vmem>>, %arg7: memref<32x6xf32, #tpu.memory_space<vmem>>, %arg8: memref<32x1xf32, #tpu.memory_space<vmem>>, %arg9: memref<32x1xf32, #tpu.memory_space<vmem>>, %arg10: memref<1x1xf32, #tpu.memory_space<vmem>>, %arg11: memref<1x3x256xf32, #tpu.memory_space<vmem>>, %arg12: memref<1x1x256xf32, #tpu.memory_space<vmem>>) attributes {dimension_semantics = [#tpu.dimension_semantics<parallel>, #tpu.dimension_semantics<parallel>], iteration_bounds = array<i64: 2, 1>, scalar_prefetch = 0 : i64, scratch_operands = 0 : i64, tpu.core_type = #tpu.core_type<tc>, window_params = [{transform_indices = @transform_0, window_bounds = array<i64: 1, 3, 256>}, {pipeline_mode = #tpu.pipeline_mode<synchronous>, transform_indices = @transform_1, window_bounds = array<i64: 32, 3>}, {pipeline_mode = #tpu.pipeline_mode<synchronous>, transform_indices = @transform_2, window_bounds = array<i64: 32, 1>}, {pipeline_mode = #tpu.pipeline_mode<synchronous>, transform_indices = @transform_3, window_bounds = array<i64: 32, 3>}, {pipeline_mode = #tpu.pipeline_mode<synchronous>, transform_indices = @transform_4, window_bounds = array<i64: 3, 1>}, {pipeline_mode = #tpu.pipeline_mode<synchronous>, transform_indices = @transform_5, window_bounds = array<i64: 32, 6>}, {pipeline_mode = #tpu.pipeline_mode<synchronous>, transform_indices = @transform_6, window_bounds = array<i64: 32, 1>}, {pipeline_mode = #tpu.pipeline_mode<synchronous>, transform_indices = @transform_7, window_bounds = array<i64: 32, 1>}, {pipeline_mode = #tpu.pipeline_mode<synchronous>, transform_indices = @transform_8, window_bounds = array<i64: 1, 1>}, {transform_indices = @transform_9, window_bounds = array<i64: 1, 3, 256>}, {transform_indices = @transform_10, window_bounds = array<i64: 1, 1, 256>}]} {
    %c0 = arith.constant 0 : index
    %c0_0 = arith.constant 0 : index
    %c0_1 = arith.constant 0 : index
    %0 = vector.load %arg2[%c0, %c0_0, %c0_1] : memref<1x3x256xf32, #tpu.memory_space<vmem>>, vector<1x3x256xf32>
    %1 = vector.shape_cast %0 : vector<1x3x256xf32> to vector<3x256xf32>
    %c0_2 = arith.constant 0 : index
    %c0_3 = arith.constant 0 : index
    %2 = vector.load %arg3[%c0_2, %c0_3] : memref<32x3xf32, #tpu.memory_space<vmem>>, vector<32x3xf32>
    %c0_4 = arith.constant 0 : index
    %c0_5 = arith.constant 0 : index
    %3 = vector.load %arg4[%c0_4, %c0_5] : memref<32x1xf32, #tpu.memory_space<vmem>>, vector<32x1xf32>
    %c0_6 = arith.constant 0 : index
    %c0_7 = arith.constant 0 : index
    %4 = vector.load %arg5[%c0_6, %c0_7] : memref<32x3xf32, #tpu.memory_space<vmem>>, vector<32x3xf32>
    %c0_8 = arith.constant 0 : index
    %c0_9 = arith.constant 0 : index
    %5 = vector.load %arg6[%c0_8, %c0_9] : memref<3x1xf32, #tpu.memory_space<vmem>>, vector<3x1xf32>
    %c0_10 = arith.constant 0 : index
    %c0_11 = arith.constant 0 : index
    %6 = vector.load %arg7[%c0_10, %c0_11] : memref<32x6xf32, #tpu.memory_space<vmem>>, vector<32x6xf32>
    %c0_12 = arith.constant 0 : index
    %c0_13 = arith.constant 0 : index
    %7 = vector.load %arg8[%c0_12, %c0_13] : memref<32x1xf32, #tpu.memory_space<vmem>>, vector<32x1xf32>
    %c0_14 = arith.constant 0 : index
    %c0_15 = arith.constant 0 : index
    %8 = vector.load %arg9[%c0_14, %c0_15] : memref<32x1xf32, #tpu.memory_space<vmem>>, vector<32x1xf32>
    %c0_16 = arith.constant 0 : index
    %c0_17 = arith.constant 0 : index
    %9 = vector.load %arg10[%c0_16, %c0_17] : memref<1x1xf32, #tpu.memory_space<vmem>>, vector<1x1xf32>
    %10 = vector.shape_cast %3 : vector<32x1xf32> to vector<32x1xf32>
    %11 = vector.broadcast %10 : vector<32x1xf32> to vector<32x256xf32>
    %12 = vector.extract_strided_slice %2 {offsets = [0, 0], sizes = [32, 1], strides = [1, 1]} : vector<32x3xf32> to vector<32x1xf32>
    %13 = vector.extract_strided_slice %1 {offsets = [0, 0], sizes = [1, 256], strides = [1, 1]} : vector<3x256xf32> to vector<1x256xf32>
    %14 = vector.broadcast %12 : vector<32x1xf32> to vector<32x256xf32>
    %15 = vector.broadcast %13 : vector<1x256xf32> to vector<32x256xf32>
    %16 = arith.mulf %14, %15 : vector<32x256xf32>
    %17 = arith.addf %11, %16 : vector<32x256xf32>
    %18 = vector.extract_strided_slice %2 {offsets = [0, 1], sizes = [32, 1], strides = [1, 1]} : vector<32x3xf32> to vector<32x1xf32>
    %19 = vector.extract_strided_slice %1 {offsets = [1, 0], sizes = [1, 256], strides = [1, 1]} : vector<3x256xf32> to vector<1x256xf32>
    %20 = vector.broadcast %18 : vector<32x1xf32> to vector<32x256xf32>
    %21 = vector.broadcast %19 : vector<1x256xf32> to vector<32x256xf32>
    %22 = arith.mulf %20, %21 : vector<32x256xf32>
    %23 = arith.addf %17, %22 : vector<32x256xf32>
    %24 = vector.extract_strided_slice %2 {offsets = [0, 2], sizes = [32, 1], strides = [1, 1]} : vector<32x3xf32> to vector<32x1xf32>
    %25 = vector.extract_strided_slice %1 {offsets = [2, 0], sizes = [1, 256], strides = [1, 1]} : vector<3x256xf32> to vector<1x256xf32>
    %26 = vector.broadcast %24 : vector<32x1xf32> to vector<32x256xf32>
    %27 = vector.broadcast %25 : vector<1x256xf32> to vector<32x256xf32>
    %28 = arith.mulf %26, %27 : vector<32x256xf32>
    %29 = arith.addf %23, %28 : vector<32x256xf32>
    %cst = arith.constant 0.000000e+00 : f32
    %30 = vector.broadcast %cst : f32 to vector<32x256xf32>
    %31 = arith.maximumf %29, %30 : vector<32x256xf32>
    %32 = vector.extract_strided_slice %4 {offsets = [0, 0], sizes = [32, 1], strides = [1, 1]} : vector<32x3xf32> to vector<32x1xf32>
    %33 = vector.broadcast %32 : vector<32x1xf32> to vector<32x256xf32>
    %34 = arith.mulf %33, %31 : vector<32x256xf32>
    %cst_18 = arith.constant dense<0.000000e+00> : vector<256xf32>
    %35 = vector.multi_reduction <add>, %34, %cst_18 [0] : vector<32x256xf32> to vector<256xf32>
    %36 = vector.shape_cast %35 : vector<256xf32> to vector<1x256xf32>
    %37 = vector.extract_strided_slice %5 {offsets = [0, 0], sizes = [1, 1], strides = [1, 1]} : vector<3x1xf32> to vector<1x1xf32>
    %38 = vector.broadcast %37 : vector<1x1xf32> to vector<1x256xf32>
    %39 = arith.addf %36, %38 : vector<1x256xf32>
    %40 = vector.extract_strided_slice %4 {offsets = [0, 1], sizes = [32, 1], strides = [1, 1]} : vector<32x3xf32> to vector<32x1xf32>
    %41 = vector.broadcast %40 : vector<32x1xf32> to vector<32x256xf32>
    %42 = arith.mulf %41, %31 : vector<32x256xf32>
    %cst_19 = arith.constant dense<0.000000e+00> : vector<256xf32>
    %43 = vector.multi_reduction <add>, %42, %cst_19 [0] : vector<32x256xf32> to vector<256xf32>
    %44 = vector.shape_cast %43 : vector<256xf32> to vector<1x256xf32>
    %45 = vector.extract_strided_slice %5 {offsets = [1, 0], sizes = [1, 1], strides = [1, 1]} : vector<3x1xf32> to vector<1x1xf32>
    %46 = vector.broadcast %45 : vector<1x1xf32> to vector<1x256xf32>
    %47 = arith.addf %44, %46 : vector<1x256xf32>
    %48 = vector.extract_strided_slice %4 {offsets = [0, 2], sizes = [32, 1], strides = [1, 1]} : vector<32x3xf32> to vector<32x1xf32>
    %49 = vector.broadcast %48 : vector<32x1xf32> to vector<32x256xf32>
    %50 = arith.mulf %49, %31 : vector<32x256xf32>
    %cst_20 = arith.constant dense<0.000000e+00> : vector<256xf32>
    %51 = vector.multi_reduction <add>, %50, %cst_20 [0] : vector<32x256xf32> to vector<256xf32>
    %52 = vector.shape_cast %51 : vector<256xf32> to vector<1x256xf32>
    %53 = vector.extract_strided_slice %5 {offsets = [2, 0], sizes = [1, 1], strides = [1, 1]} : vector<3x1xf32> to vector<1x1xf32>
    %54 = vector.broadcast %53 : vector<1x1xf32> to vector<1x256xf32>
    %55 = arith.addf %52, %54 : vector<1x256xf32>
    %56 = tpu.concatenate %39, %47, %55 in 0 : vector<1x256xf32>, vector<1x256xf32>, vector<1x256xf32> -> vector<3x256xf32>
    %c0_21 = arith.constant 0 : index
    %c0_22 = arith.constant 0 : index
    %c0_23 = arith.constant 0 : index
    %57 = vector.load %arg11[%c0_21, %c0_22, %c0_23] : memref<1x3x256xf32, #tpu.memory_space<vmem>>, vector<1x3x256xf32>
    %58 = vector.shape_cast %57 : vector<1x3x256xf32> to vector<3x256xf32>
    %59 = vector.shape_cast %56 : vector<3x256xf32> to vector<1x3x256xf32>
    tpu.vector_store %arg11[%c0_21, %c0_22, %c0_23], %59 {strides = array<i32>} : memref<1x3x256xf32, #tpu.memory_space<vmem>>, vector<1x3x256xf32>,
    %60 = arith.maximumf %39, %47 : vector<1x256xf32>
    %61 = arith.maximumf %60, %55 : vector<1x256xf32>
    %62 = arith.subf %39, %61 : vector<1x256xf32>
    %63 = math.exp %62 : vector<1x256xf32>
    %64 = arith.subf %47, %61 : vector<1x256xf32>
    %65 = math.exp %64 : vector<1x256xf32>
    %66 = arith.subf %55, %61 : vector<1x256xf32>
    %67 = math.exp %66 : vector<1x256xf32>
    %68 = arith.addf %63, %65 : vector<1x256xf32>
    %69 = arith.addf %68, %67 : vector<1x256xf32>
    %70 = tpu.reciprocal %69 {approx = true} : vector<1x256xf32> -> vector<1x256xf32>
    %71 = arith.mulf %63, %70 : vector<1x256xf32>
    %72 = arith.mulf %65, %70 : vector<1x256xf32>
    %73 = arith.mulf %67, %70 : vector<1x256xf32>
    %74 = vector.extract_strided_slice %1 {offsets = [0, 0], sizes = [1, 256], strides = [1, 1]} : vector<3x256xf32> to vector<1x256xf32>
    %75 = vector.extract_strided_slice %1 {offsets = [1, 0], sizes = [1, 256], strides = [1, 1]} : vector<3x256xf32> to vector<1x256xf32>
    %76 = vector.extract_strided_slice %1 {offsets = [2, 0], sizes = [1, 256], strides = [1, 1]} : vector<3x256xf32> to vector<1x256xf32>
    %77 = vector.shape_cast %7 : vector<32x1xf32> to vector<32x1xf32>
    %78 = vector.broadcast %77 : vector<32x1xf32> to vector<32x256xf32>
    %79 = vector.extract_strided_slice %6 {offsets = [0, 0], sizes = [32, 1], strides = [1, 1]} : vector<32x6xf32> to vector<32x1xf32>
    %80 = vector.broadcast %79 : vector<32x1xf32> to vector<32x256xf32>
    %81 = vector.broadcast %74 : vector<1x256xf32> to vector<32x256xf32>
    %82 = arith.mulf %80, %81 : vector<32x256xf32>
    %83 = arith.addf %78, %82 : vector<32x256xf32>
    %84 = vector.extract_strided_slice %6 {offsets = [0, 1], sizes = [32, 1], strides = [1, 1]} : vector<32x6xf32> to vector<32x1xf32>
    %85 = vector.broadcast %84 : vector<32x1xf32> to vector<32x256xf32>
    %86 = vector.broadcast %75 : vector<1x256xf32> to vector<32x256xf32>
    %87 = arith.mulf %85, %86 : vector<32x256xf32>
    %88 = arith.addf %83, %87 : vector<32x256xf32>
    %89 = vector.extract_strided_slice %6 {offsets = [0, 2], sizes = [32, 1], strides = [1, 1]} : vector<32x6xf32> to vector<32x1xf32>
    %90 = vector.broadcast %89 : vector<32x1xf32> to vector<32x256xf32>
    %91 = vector.broadcast %76 : vector<1x256xf32> to vector<32x256xf32>
    %92 = arith.mulf %90, %91 : vector<32x256xf32>
    %93 = arith.addf %88, %92 : vector<32x256xf32>
    %94 = vector.extract_strided_slice %6 {offsets = [0, 3], sizes = [32, 1], strides = [1, 1]} : vector<32x6xf32> to vector<32x1xf32>
    %95 = vector.broadcast %94 : vector<32x1xf32> to vector<32x256xf32>
    %96 = vector.broadcast %71 : vector<1x256xf32> to vector<32x256xf32>
    %97 = arith.mulf %95, %96 : vector<32x256xf32>
    %98 = arith.addf %93, %97 : vector<32x256xf32>
    %99 = vector.extract_strided_slice %6 {offsets = [0, 4], sizes = [32, 1], strides = [1, 1]} : vector<32x6xf32> to vector<32x1xf32>
    %100 = vector.broadcast %99 : vector<32x1xf32> to vector<32x256xf32>
    %101 = vector.broadcast %72 : vector<1x256xf32> to vector<32x256xf32>
    %102 = arith.mulf %100, %101 : vector<32x256xf32>
    %103 = arith.addf %98, %102 : vector<32x256xf32>
    %104 = vector.extract_strided_slice %6 {offsets = [0, 5], sizes = [32, 1], strides = [1, 1]} : vector<32x6xf32> to vector<32x1xf32>
    %105 = vector.broadcast %104 : vector<32x1xf32> to vector<32x256xf32>
    %106 = vector.broadcast %73 : vector<1x256xf32> to vector<32x256xf32>
    %107 = arith.mulf %105, %106 : vector<32x256xf32>
    %108 = arith.addf %103, %107 : vector<32x256xf32>
    %cst_24 = arith.constant 0.000000e+00 : f32
    %109 = vector.broadcast %cst_24 : f32 to vector<32x256xf32>
    %110 = arith.maximumf %108, %109 : vector<32x256xf32>
    %111 = vector.broadcast %8 : vector<32x1xf32> to vector<32x256xf32>
    %112 = arith.mulf %111, %110 : vector<32x256xf32>
    %cst_25 = arith.constant dense<0.000000e+00> : vector<256xf32>
    %113 = vector.multi_reduction <add>, %112, %cst_25 [0] : vector<32x256xf32> to vector<256xf32>
    %114 = vector.shape_cast %113 : vector<256xf32> to vector<1x256xf32>
    %115 = vector.broadcast %9 : vector<1x1xf32> to vector<1x256xf32>
    %116 = arith.addf %114, %115 : vector<1x256xf32>
    %117 = arith.mulf %73, %116 : vector<1x256xf32>
    %118 = arith.addf %72, %117 : vector<1x256xf32>
    %c0_26 = arith.constant 0 : index
    %c0_27 = arith.constant 0 : index
    %c0_28 = arith.constant 0 : index
    %119 = vector.load %arg12[%c0_26, %c0_27, %c0_28] : memref<1x1x256xf32, #tpu.memory_space<vmem>>, vector<1x1x256xf32>
    %120 = vector.shape_cast %119 : vector<1x1x256xf32> to vector<1x256xf32>
    %121 = vector.shape_cast %118 : vector<1x256xf32> to vector<1x1x256xf32>
    tpu.vector_store %arg12[%c0_26, %c0_27, %c0_28], %121 {strides = array<i32>} : memref<1x1x256xf32, #tpu.memory_space<vmem>>, vector<1x1x256xf32>,
    return
  }
  func.func @transform_0(%arg0: i32, %arg1: i32) -> (i32, i32, i32) {
    %c0_i32 = arith.constant 0 : i32
    %c0_i32_0 = arith.constant 0 : i32
    return %arg0, %c0_i32, %arg1 : i32, i32, i32
  }
  func.func @transform_1(%arg0: i32, %arg1: i32) -> (i32, i32) {
    %c0_i32 = arith.constant 0 : i32
    %c0_i32_0 = arith.constant 0 : i32
    %c0_i32_1 = arith.constant 0 : i32
    return %c0_i32, %c0_i32_0 : i32, i32
  }
  func.func @transform_2(%arg0: i32, %arg1: i32) -> (i32, i32) {
    %c0_i32 = arith.constant 0 : i32
    %c0_i32_0 = arith.constant 0 : i32
    %c0_i32_1 = arith.constant 0 : i32
    return %c0_i32, %c0_i32_0 : i32, i32
  }
  func.func @transform_3(%arg0: i32, %arg1: i32) -> (i32, i32) {
    %c0_i32 = arith.constant 0 : i32
    %c0_i32_0 = arith.constant 0 : i32
    %c0_i32_1 = arith.constant 0 : i32
    return %c0_i32, %c0_i32_0 : i32, i32
  }
  func.func @transform_4(%arg0: i32, %arg1: i32) -> (i32, i32) {
    %c0_i32 = arith.constant 0 : i32
    %c0_i32_0 = arith.constant 0 : i32
    %c0_i32_1 = arith.constant 0 : i32
    return %c0_i32, %c0_i32_0 : i32, i32
  }
  func.func @transform_5(%arg0: i32, %arg1: i32) -> (i32, i32) {
    %c0_i32 = arith.constant 0 : i32
    %c0_i32_0 = arith.constant 0 : i32
    %c0_i32_1 = arith.constant 0 : i32
    return %c0_i32, %c0_i32_0 : i32, i32
  }
  func.func @transform_6(%arg0: i32, %arg1: i32) -> (i32, i32) {
    %c0_i32 = arith.constant 0 : i32
    %c0_i32_0 = arith.constant 0 : i32
    %c0_i32_1 = arith.constant 0 : i32
    return %c0_i32, %c0_i32_0 : i32, i32
  }
  func.func @transform_7(%arg0: i32, %arg1: i32) -> (i32, i32) {
    %c0_i32 = arith.constant 0 : i32
    %c0_i32_0 = arith.constant 0 : i32
    %c0_i32_1 = arith.constant 0 : i32
    return %c0_i32, %c0_i32_0 : i32, i32
  }
  func.func @transform_8(%arg0: i32, %arg1: i32) -> (i32, i32) {
    %c0_i32 = arith.constant 0 : i32
    %c0_i32_0 = arith.constant 0 : i32
    %c0_i32_1 = arith.constant 0 : i32
    return %c0_i32, %c0_i32_0 : i32, i32
  }
  func.func @transform_9(%arg0: i32, %arg1: i32) -> (i32, i32, i32) {
    %c0_i32 = arith.constant 0 : i32
    %c0_i32_0 = arith.constant 0 : i32
    return %arg0, %c0_i32, %arg1 : i32, i32, i32
  }
  func.func @transform_10(%arg0: i32, %arg1: i32) -> (i32, i32, i32) {
    %c0_i32 = arith.constant 0 : i32
    %c0_i32_0 = arith.constant 0 : i32
    return %arg0, %c0_i32, %arg1 : i32, i32, i32
  }
}

</mosaic_0001>

<llo_original>
// kernel: shm_net_forward.1
$region0: #{shm_net_forward.1}
  #allocation0 [shape = 'u32[]', space=smem, size = 0x4, offset = 0x4, fixed_abs, tag = 'smem constant byte address 0x4 - core index']
  #allocation1 [shape = 'u32[144,128]{1,0:T(1,128)}', space=vmem, size = 0x12000, scoped, tag = 'internal scratch']
  #allocation2 [shape = 'f32[1,1]{1,0:T(1,128)S(1)}', space=vmem, size = 0x200, scoped, tag = 'scoped memory for shm_net_forward.1']
  %s0 = inlined_call_operand.vmem [shape: f32[2,3,256], index: 0, kind: input, shape index: {}]
  %s1 = inlined_call_operand.vmem [shape: f32[32,3], index: 1, kind: input, shape index: {}]
  %s2 = inlined_call_operand.vmem [shape: f32[32,1], index: 2, kind: input, shape index: {}]
  %s3 = inlined_call_operand.vmem [shape: f32[32,3], index: 3, kind: input, shape index: {}]
  %s4 = inlined_call_operand.vmem [shape: f32[3,1], index: 4, kind: input, shape index: {}]
  %s5 = inlined_call_operand.vmem [shape: f32[32,6], index: 5, kind: input, shape index: {}]
  %s6 = inlined_call_operand.vmem [shape: f32[32,1], index: 6, kind: input, shape index: {}]
  %s7 = inlined_call_operand.vmem [shape: f32[32,1], index: 7, kind: input, shape index: {}]
  %s8 = inlined_call_operand.<no memory space> [shape: f32[1,1], index: 8, kind: input, shape index: {}]
  %s9 = inlined_call_operand.vmem [shape: f32[2,3,256], index: 9, kind: output, shape index: {0}]
  %s10 = inlined_call_operand.vmem [shape: f32[2,1,256], index: 10, kind: output, shape index: {1}]
  %11 = xla_tuple %s9, %s10
  %s12 = sld [smem:[#allocation0]]
  $region77: #{shm_net_forward.1} parent=0
    _
  %s14 = ssub.s32 1, %s12
  %s15 = scalar_select 0, %s14, %s12
  %v16 = vstv %s8
  %17 = vst [vmem:[#allocation2] sm:$0x1] %v16
  loop: start=0, step=1, limit=4
  $region2: #{shm_net_forward.1} parent=0 // loop_pre_header
    _
  $region3: #{shm_net_forward.1} parent=0 // loop_header
    %s19 = sphi 0, %s23
    %p20 = scmp.ge.s32.totalorder %s19, 4
    %s26 = sphi 0, %s38
    %s27 = sphi 0, %s34
    %s28 = sphi 0, %s26
    %s29 = sphi 0, %s27
    %s30 = sphi 0, %s28
    %s31 = sphi 0, %s29
    %s43 = sphi 0, %s45
    %s46 = sphi 0, %s43
    %s47 = sphi 0, %s46
    %s63 = sphi 0, %s47
    %s67 = sphi 0, %s67
    %s69 = sphi 0, %s67
    %s70 = sphi 0, %s69
    %s84 = sphi 0, %s70
    %s88 = sphi 0, %s88
    %s90 = sphi 0, %s88
    %s91 = sphi 0, %s90
    %s105 = sphi 0, %s91
    %s109 = sphi 0, %s109
    %s111 = sphi 0, %s109
    %s112 = sphi 0, %s111
    %s126 = sphi 0, %s112
    %s130 = sphi 0, %s130
    %s132 = sphi 0, %s130
    %s133 = sphi 0, %s132
    %s147 = sphi 0, %s133
    %s151 = sphi 0, %s151
    %s153 = sphi 0, %s151
    %s154 = sphi 0, %s153
    %s168 = sphi 0, %s154
    %s172 = sphi 0, %s172
    %s174 = sphi 0, %s172
    %s175 = sphi 0, %s174
    %s189 = sphi 0, %s175
    %s193 = sphi 0, %s193
    %s195 = sphi 0, %s193
    %s196 = sphi 0, %s195
    %s210 = sphi 0, %s196
    %s214 = sphi 0, %s214
    %s216 = sphi 0, %s214
    %s217 = sphi 0, %s216
    %s231 = sphi 0, %s217
    %s239 = sphi 0, %s241
    %s242 = sphi 0, %s239
    %s243 = sphi 0, %s242
    %s259 = sphi 0, %s243
    %s267 = sphi 0, %s269
    %s270 = sphi 0, %s267
    %s271 = sphi 0, %s270
    %s287 = sphi 0, %s271
  $region4: #{shm_net_forward.1} parent=0 // loop_header_branch
    %22 = sbr.rel (%p20) target = $region8
  $region5: #{shm_net_forward.1} parent=0 // loop_body
    %s24 = ssub.s32 %s19, 1
    %s25 = ssub.s32 %s19, 2
    %s32 = sadd.s32 1, %s27
    %p33 = scmp.ge.s32.totalorder %s32, 1
    %s34 = scalar_select %p33, 0, %s32
    %s35 = sadd.s32 1, %s26
    %s36 = scalar_select %p33, %s35, %s26
    %p37 = scmp.ge.s32.totalorder %s36, 2
    %s38 = scalar_select %p37, 0, %s36
    %s39 = ssub.s32 %s26, %s38
    %s40 = ssub.s32 %s27, %s34
    %s41 = sor.u32 %s39, %s40
    %p42 = scmp.eq.s32.totalorder %s41, 0
    %s44 = sadd.s32 %s43, 1
    %s45 = scalar_select %p42, %s43, %s44
    %p48 = pneg %p42
    %p49 = scmp.eq.s32.totalorder %s19, 1
    %p50 = por %p48, %p49
    %p51 = scmp.ne.s32.totalorder %s43, %s46
    %p52 = scmp.eq.s32.totalorder %s19, 0
    %p53 = por %p51, %p52
    %p54 = scmp.ne.s32.totalorder %s43, %s46
    %p55 = scmp.eq.s32.totalorder %s24, 1
    %p56 = por %p54, %p55
    %p57 = scmp.ne.s32.totalorder %s46, %s47
    %p58 = scmp.eq.s32.totalorder %s24, 0
    %p59 = por %p57, %p58
    %p60 = scmp.ne.s32.totalorder %s46, %s47
    %p61 = scmp.eq.s32.totalorder %s25, 1
    %p62 = por %p60, %p61
    %p64 = scmp.ne.s32.totalorder %s47, %s63
    %p65 = scmp.eq.s32.totalorder %s25, 0
    %p66 = por %p64, %p65
    %s68 = sadd.s32 %s67, 1
    %p71 = scmp.eq.s32.totalorder %s19, 1
    %p72 = scmp.ne.s32.totalorder %s67, %s69
    %p73 = scmp.eq.s32.totalorder %s19, 0
    %p74 = por %p72, %p73
    %p75 = scmp.ne.s32.totalorder %s67, %s69
    %p76 = scmp.eq.s32.totalorder %s24, 1
    %p77 = por %p75, %p76
    %p78 = scmp.ne.s32.totalorder %s69, %s70
    %p79 = scmp.eq.s32.totalorder %s24, 0
    %p80 = por %p78, %p79
    %p81 = scmp.ne.s32.totalorder %s69, %s70
    %p82 = scmp.eq.s32.totalorder %s25, 1
    %p83 = por %p81, %p82
    %p85 = scmp.ne.s32.totalorder %s70, %s84
    %p86 = scmp.eq.s32.totalorder %s25, 0
    %p87 = por %p85, %p86
    %s89 = sadd.s32 %s88, 1
    %p92 = scmp.eq.s32.totalorder %s19, 1
    %p93 = scmp.ne.s32.totalorder %s88, %s90
    %p94 = scmp.eq.s32.totalorder %s19, 0
    %p95 = por %p93, %p94
    %p96 = scmp.ne.s32.totalorder %s88, %s90
    %p97 = scmp.eq.s32.totalorder %s24, 1
    %p98 = por %p96, %p97
    %p99 = scmp.ne.s32.totalorder %s90, %s91
    %p100 = scmp.eq.s32.totalorder %s24, 0
    %p101 = por %p99, %p100
    %p102 = scmp.ne.s32.totalorder %s90, %s91
    %p103 = scmp.eq.s32.totalorder %s25, 1
    %p104 = por %p102, %p103
    %p106 = scmp.ne.s32.totalorder %s91, %s105
    %p107 = scmp.eq.s32.totalorder %s25, 0
    %p108 = por %p106, %p107
    %s110 = sadd.s32 %s109, 1
    %p113 = scmp.eq.s32.totalorder %s19, 1
    %p114 = scmp.ne.s32.totalorder %s109, %s111
    %p115 = scmp.eq.s32.totalorder %s19, 0
    %p116 = por %p114, %p115
    %p117 = scmp.ne.s32.totalorder %s109, %s111
    %p118 = scmp.eq.s32.totalorder %s24, 1
    %p119 = por %p117, %p118
    %p120 = scmp.ne.s32.totalorder %s111, %s112
    %p121 = scmp.eq.s32.totalorder %s24, 0
    %p122 = por %p120, %p121
    %p123 = scmp.ne.s32.totalorder %s111, %s112
    %p124 = scmp.eq.s32.totalorder %s25, 1
    %p125 = por %p123, %p124
    %p127 = scmp.ne.s32.totalorder %s112, %s126
    %p128 = scmp.eq.s32.totalorder %s25, 0
    %p129 = por %p127, %p128
    %s131 = sadd.s32 %s130, 1
    %p134 = scmp.eq.s32.totalorder %s19, 1
    %p135 = scmp.ne.s32.totalorder %s130, %s132
    %p136 = scmp.eq.s32.totalorder %s19, 0
    %p137 = por %p135, %p136
    %p138 = scmp.ne.s32.totalorder %s130, %s132
    %p139 = scmp.eq.s32.totalorder %s24, 1
    %p140 = por %p138, %p139
    %p141 = scmp.ne.s32.totalorder %s132, %s133
    %p142 = scmp.eq.s32.totalorder %s24, 0
    %p143 = por %p141, %p142
    %p144 = scmp.ne.s32.totalorder %s132, %s133
    %p145 = scmp.eq.s32.totalorder %s25, 1
    %p146 = por %p144, %p145
    %p148 = scmp.ne.s32.totalorder %s133, %s147
    %p149 = scmp.eq.s32.totalorder %s25, 0
    %p150 = por %p148, %p149
    %s152 = sadd.s32 %s151, 1
    %p155 = scmp.eq.s32.totalorder %s19, 1
    %p156 = scmp.ne.s32.totalorder %s151, %s153
    %p157 = scmp.eq.s32.totalorder %s19, 0
    %p158 = por %p156, %p157
    %p159 = scmp.ne.s32.totalorder %s151, %s153
    %p160 = scmp.eq.s32.totalorder %s24, 1
    %p161 = por %p159, %p160
    %p162 = scmp.ne.s32.totalorder %s153, %s154
    %p163 = scmp.eq.s32.totalorder %s24, 0
    %p164 = por %p162, %p163
    %p165 = scmp.ne.s32.totalorder %s153, %s154
    %p166 = scmp.eq.s32.totalorder %s25, 1
    %p167 = por %p165, %p166
    %p169 = scmp.ne.s32.totalorder %s154, %s168
    %p170 = scmp.eq.s32.totalorder %s25, 0
    %p171 = por %p169, %p170
    %s173 = sadd.s32 %s172, 1
    %p176 = scmp.eq.s32.totalorder %s19, 1
    %p177 = scmp.ne.s32.totalorder %s172, %s174
    %p178 = scmp.eq.s32.totalorder %s19, 0
    %p179 = por %p177, %p178
    %p180 = scmp.ne.s32.totalorder %s172, %s174
    %p181 = scmp.eq.s32.totalorder %s24, 1
    %p182 = por %p180, %p181
    %p183 = scmp.ne.s32.totalorder %s174, %s175
    %p184 = scmp.eq.s32.totalorder %s24, 0
    %p185 = por %p183, %p184
    %p186 = scmp.ne.s32.totalorder %s174, %s175
    %p187 = scmp.eq.s32.totalorder %s25, 1
    %p188 = por %p186, %p187
    %p190 = scmp.ne.s32.totalorder %s175, %s189
    %p191 = scmp.eq.s32.totalorder %s25, 0
    %p192 = por %p190, %p191
    %s194 = sadd.s32 %s193, 1
    %p197 = scmp.eq.s32.totalorder %s19, 1
    %p198 = scmp.ne.s32.totalorder %s193, %s195
    %p199 = scmp.eq.s32.totalorder %s19, 0
    %p200 = por %p198, %p199
    %p201 = scmp.ne.s32.totalorder %s193, %s195
    %p202 = scmp.eq.s32.totalorder %s24, 1
    %p203 = por %p201, %p202
    %p204 = scmp.ne.s32.totalorder %s195, %s196
    %p205 = scmp.eq.s32.totalorder %s24, 0
    %p206 = por %p204, %p205
    %p207 = scmp.ne.s32.totalorder %s195, %s196
    %p208 = scmp.eq.s32.totalorder %s25, 1
    %p209 = por %p207, %p208
    %p211 = scmp.ne.s32.totalorder %s196, %s210
    %p212 = scmp.eq.s32.totalorder %s25, 0
    %p213 = por %p211, %p212
    %s215 = sadd.s32 %s214, 1
    %p218 = scmp.eq.s32.totalorder %s19, 1
    %p219 = scmp.ne.s32.totalorder %s214, %s216
    %p220 = scmp.eq.s32.totalorder %s19, 0
    %p221 = por %p219, %p220
    %p222 = scmp.ne.s32.totalorder %s214, %s216
    %p223 = scmp.eq.s32.totalorder %s24, 1
    %p224 = por %p222, %p223
    %p225 = scmp.ne.s32.totalorder %s216, %s217
    %p226 = scmp.eq.s32.totalorder %s24, 0
    %p227 = por %p225, %p226
    %p228 = scmp.ne.s32.totalorder %s216, %s217
    %p229 = scmp.eq.s32.totalorder %s25, 1
    %p230 = por %p228, %p229
    %p232 = scmp.ne.s32.totalorder %s217, %s231
    %p233 = scmp.eq.s32.totalorder %s25, 0
    %p234 = por %p232, %p233
    %s235 = ssub.s32 %s26, %s38
    %s236 = ssub.s32 %s27, %s34
    %s237 = sor.u32 %s235, %s236
    %p238 = scmp.eq.s32.totalorder %s237, 0
    %s240 = sadd.s32 %s239, 1
    %s241 = scalar_select %p238, %s239, %s240
    %p244 = pneg %p238
    %p245 = scmp.eq.s32.totalorder %s19, 1
    %p246 = por %p244, %p245
    %p247 = scmp.ne.s32.totalorder %s239, %s242
    %p248 = scmp.eq.s32.totalorder %s19, 0
    %p249 = por %p247, %p248
    %p250 = scmp.ne.s32.totalorder %s239, %s242
    %p251 = scmp.eq.s32.totalorder %s24, 1
    %p252 = por %p250, %p251
    %p253 = scmp.ne.s32.totalorder %s242, %s243
    %p254 = scmp.eq.s32.totalorder %s24, 0
    %p255 = por %p253, %p254
    %p256 = scmp.ne.s32.totalorder %s242, %s243
    %p257 = scmp.eq.s32.totalorder %s25, 1
    %p258 = por %p256, %p257
    %p260 = scmp.ne.s32.totalorder %s243, %s259
    %p261 = scmp.eq.s32.totalorder %s25, 0
    %p262 = por %p260, %p261
    %s263 = ssub.s32 %s26, %s38
    %s264 = ssub.s32 %s27, %s34
    %s265 = sor.u32 %s263, %s264
    %p266 = scmp.eq.s32.totalorder %s265, 0
    %s268 = sadd.s32 %s267, 1
    %s269 = scalar_select %p266, %s267, %s268
    %p272 = pneg %p266
    %p273 = scmp.eq.s32.totalorder %s19, 1
    %p274 = por %p272, %p273
    %p275 = scmp.ne.s32.totalorder %s267, %s270
    %p276 = scmp.eq.s32.totalorder %s19, 0
    %p277 = por %p275, %p276
    %p278 = scmp.ne.s32.totalorder %s267, %s270
    %p279 = scmp.eq.s32.totalorder %s24, 1
    %p280 = por %p278, %p279
    %p281 = scmp.ne.s32.totalorder %s270, %s271
    %p282 = scmp.eq.s32.totalorder %s24, 0
    %p283 = por %p281, %p282
    %p284 = scmp.ne.s32.totalorder %s270, %s271
    %p285 = scmp.eq.s32.totalorder %s25, 1
    %p286 = por %p284, %p285
    %p288 = scmp.ne.s32.totalorder %s271, %s287
    %p289 = scmp.eq.s32.totalorder %s25, 0
    %p290 = por %p288, %p289
    %p291 = scmp.le.s32.totalorder 1, %s19
    %p292 = scmp.lt.s32.totalorder %s19, 3
    %p293 = pnand %p291, %p292
    %p294 = pneg %p293
    // Predicated region
    $region9: #{shm_net_forward.1} parent=5 // pred_check
      _
    $region10: #{shm_net_forward.1} parent=5 // pred_check_branch
      %296 = sbr.rel (%p293) target = $region12
    $region11: #{shm_net_forward.1} parent=5 // pred_region
      %s297 = ssub.s32 %s19, 1
      // Predicated region
      $region13: #{shm_net_forward.1} parent=11 // pred_check
        %p298 = pneg %p80
      $region14: #{shm_net_forward.1} parent=11 // pred_check_branch
        %300 = sbr.rel (%p298) target = $region16
      $region15: #{shm_net_forward.1} parent=11 // pred_region
        _
      $region16: #{shm_net_forward.1} parent=11 // pred_fallthru
        _
      // Predicated region
      $region17: #{shm_net_forward.1} parent=11 // pred_check
        %p301 = pneg %p101
      $region18: #{shm_net_forward.1} parent=11 // pred_check_branch
        %303 = sbr.rel (%p301) target = $region20
      $region19: #{shm_net_forward.1} parent=11 // pred_region
        _
      $region20: #{shm_net_forward.1} parent=11 // pred_fallthru
        _
      // Predicated region
      $region21: #{shm_net_forward.1} parent=11 // pred_check
        %p304 = pneg %p122
      $region22: #{shm_net_forward.1} parent=11 // pred_check_branch
        %306 = sbr.rel (%p304) target = $region24
      $region23: #{shm_net_forward.1} parent=11 // pred_region
        _
      $region24: #{shm_net_forward.1} parent=11 // pred_fallthru
        _
      // Predicated region
      $region25: #{shm_net_forward.1} parent=11 // pred_check
        %p307 = pneg %p143
      $region26: #{shm_net_forward.1} parent=11 // pred_check_branch
        %309 = sbr.rel (%p307) target = $region28
      $region27: #{shm_net_forward.1} parent=11 // pred_region
        _
      $region28: #{shm_net_forward.1} parent=11 // pred_fallthru
        _
      // Predicated region
      $region29: #{shm_net_forward.1} parent=11 // pred_check
        %p310 = pneg %p164
      $region30: #{shm_net_forward.1} parent=11 // pred_check_branch
        %312 = sbr.rel (%p310) target = $region32
      $region31: #{shm_net_forward.1} parent=11 // pred_region
        _
      $region32: #{shm_net_forward.1} parent=11 // pred_fallthru
        _
      // Predicated region
      $region33: #{shm_net_forward.1} parent=11 // pred_check
        %p313 = pneg %p185
      $region34: #{shm_net_forward.1} parent=11 // pred_check_branch
        %315 = sbr.rel (%p313) target = $region36
      $region35: #{shm_net_forward.1} parent=11 // pred_region
        _
      $region36: #{shm_net_forward.1} parent=11 // pred_fallthru
        _
      // Predicated region
      $region37: #{shm_net_forward.1} parent=11 // pred_check
        %p316 = pneg %p206
      $region38: #{shm_net_forward.1} parent=11 // pred_check_branch
        %318 = sbr.rel (%p316) target = $region40
      $region39: #{shm_net_forward.1} parent=11 // pred_region
        _
      $region40: #{shm_net_forward.1} parent=11 // pred_fallthru
        _
      // Predicated region
      $region41: #{shm_net_forward.1} parent=11 // pred_check
        %p319 = pneg %p227
      $region42: #{shm_net_forward.1} parent=11 // pred_check_branch
        %321 = sbr.rel (%p319) target = $region44
      $region43: #{shm_net_forward.1} parent=11 // pred_region
        _
      $region44: #{shm_net_forward.1} parent=11 // pred_fallthru
        _
    $region12: #{shm_net_forward.1} parent=5 // pred_fallthru
      _
    %p322 = scmp.lt.s32.totalorder %s19, 2
    // Predicated region
    $region45: #{shm_net_forward.1} parent=5 // pred_check
      %p323 = pneg %p322
    $region46: #{shm_net_forward.1} parent=5 // pred_check_branch
      %325 = sbr.rel (%p323) target = $region48
    $region47: #{shm_net_forward.1} parent=5 // pred_region
      // Predicated region
      $region49: #{shm_net_forward.1} parent=47 // pred_check
        %p326 = pneg %p53
      $region50: #{shm_net_forward.1} parent=47 // pred_check_branch
        %328 = sbr.rel (%p326) target = $region52
      $region51: #{shm_net_forward.1} parent=47 // pred_region
        %s329 = smul.u32 2, %s27
        %p330 = scmp.lt.s32.totalorder %s26, 1
        %s331 = scalar_select %p330, %s26, 1
        %p332 = scmp.lt.s32.totalorder %s329, 1
        %s333 = scalar_select %p332, %s329, 1
        %s334 = smul.addr %s331, 2
        %s335 = sadd.s32 %s333, %s334
        %s336 = smul.addr %s335, 4
        %s337 = scalar_lea.vmem %s0, %s336
        %s338 = smul.u32 2, %s27
      $region52: #{shm_net_forward.1} parent=47 // pred_fallthru
        _
    $region48: #{shm_net_forward.1} parent=5 // pred_fallthru
      _
    %p339 = scmp.le.s32.totalorder 1, %s19
    %p340 = scmp.lt.s32.totalorder %s19, 3
    %p341 = pnand %p339, %p340
    %p342 = pneg %p341
    // Predicated region
    $region53: #{shm_net_forward.1} parent=5 // pred_check
      _
    $region54: #{shm_net_forward.1} parent=5 // pred_check_branch
      %344 = sbr.rel (%p341) target = $region56
    $region55: #{shm_net_forward.1} parent=5 // pred_region
      %s345 = ssub.s32 %s19, 1
      %s346 = smul.u32 2, %s29
      %p347 = scmp.lt.s32.totalorder %s28, 1
      %s348 = scalar_select %p347, %s28, 1
      %p349 = scmp.lt.s32.totalorder %s346, 1
      %s350 = scalar_select %p349, %s346, 1
      %s351 = smul.addr %s348, 2
      %s352 = sadd.s32 %s350, %s351
      %s353 = smul.addr %s352, 4
      %s354 = scalar_lea.vmem %s0, %s353
      %p355 = pneg %p59
      %p356 = pneg %p56
      %p357 = pneg %p80
      %p358 = pneg %p77
      %p359 = pneg %p101
      %p360 = pneg %p98
      %p361 = pneg %p122
      %p362 = pneg %p119
      %p363 = pneg %p143
      %p364 = pneg %p140
      %p365 = pneg %p164
      %p366 = pneg %p161
      %p367 = pneg %p185
      %p368 = pneg %p182
      %p369 = pneg %p206
      %p370 = pneg %p203
      %p371 = pneg %p227
      %p372 = pneg %p224
      %p373 = pneg %p255
      %p374 = pneg %p252
      %s375 = smul.u32 2, %s29
      %p376 = scmp.lt.s32.totalorder %s28, 1
      %s377 = scalar_select %p376, %s28, 1
      %p378 = scmp.lt.s32.totalorder %s375, 1
      %s379 = scalar_select %p378, %s375, 1
      %s380 = smul.addr %s377, 2
      %s381 = sadd.s32 %s379, %s380
      %s382 = smul.addr %s381, 4
      %s383 = scalar_lea.vmem %s9, %s382
      %p384 = pneg %p283
      %p385 = pneg %p280
      %s386 = smul.u32 2, %s29
      %p387 = scmp.lt.s32.totalorder %s28, 1
      %s388 = scalar_select %p387, %s28, 1
      %p389 = scmp.lt.s32.totalorder %s386, 1
      %s390 = scalar_select %p389, %s386, 1
      %s391 = smul.addr %s388, 2
      %s392 = sadd.s32 %s390, %s391
      %s393 = scalar_lea.vmem %s10, %s392
      %s394 = smul.u32 2, %s29
      %p395 = scmp.lt.s32.totalorder %s28, 1
      %s396 = scalar_select %p395, %s28, 1
      %p397 = scmp.lt.s32.totalorder %s394, 1
      %s398 = scalar_select %p397, %s394, 1
      %s399 = smul.addr %s396, 2
      %s400 = sadd.s32 %s398, %s399
      %s401 = smul.addr %s400, 4
      %s402 = scalar_lea.vmem %s0, %s401
      %s403 = smul.u32 2, %s29
      %s404 = smul.u32 2, %s29
      %p405 = scmp.lt.s32.totalorder %s28, 1
      %s406 = scalar_select %p405, %s28, 1
      %p407 = scmp.lt.s32.totalorder %s404, 1
      %s408 = scalar_select %p407, %s404, 1
      %s409 = smul.addr %s406, 2
      %s410 = sadd.s32 %s408, %s409
      %s411 = smul.addr %s410, 4
      %s412 = scalar_lea.vmem %s9, %s411
      %s413 = smul.u32 2, %s29
      %s414 = smul.u32 2, %s29
      %p415 = scmp.lt.s32.totalorder %s28, 1
      %s416 = scalar_select %p415, %s28, 1
      %p417 = scmp.lt.s32.totalorder %s414, 1
      %s418 = scalar_select %p417, %s414, 1
      %s419 = smul.addr %s416, 2
      %s420 = sadd.s32 %s418, %s419
      %s421 = scalar_lea.vmem %s10, %s420
      %s422 = smul.u32 2, %s29
      %v423 = vld [vmem:[%s402] sm:$0x77]
      %v424 = vld [vmem:[%s1] sm:$0xff]
      %v425 = vld [vmem:[%s1 + $0x8] sm:$0xff]
      %v426 = vld [vmem:[%s1 + $0x10] sm:$0xff]
      %v427 = vld [vmem:[%s1 + $0x18] sm:$0xff]
      %v428 = vld [vmem:[%s2] sm:$0xff]
      %v429 = vld [vmem:[%s2 + $0x8] sm:$0xff]
      %v430 = vld [vmem:[%s2 + $0x10] sm:$0xff]
      %v431 = vld [vmem:[%s2 + $0x18] sm:$0xff]
      %v432 = vld [vmem:[%s3] sm:$0xff]
      %v433 = vld [vmem:[%s3 + $0x8] sm:$0xff]
      %v434 = vld [vmem:[%s3 + $0x10] sm:$0xff]
      %v435 = vld [vmem:[%s3 + $0x18] sm:$0xff]
      %v436 = vld [vmem:[%s4] sm:$0x7]
      %v437 = vld [vmem:[%s5] sm:$0xff]
      %v438 = vld [vmem:[%s5 + $0x8] sm:$0xff]
      %v439 = vld [vmem:[%s5 + $0x10] sm:$0xff]
      %v440 = vld [vmem:[%s5 + $0x18] sm:$0xff]
      %v441 = vld [vmem:[%s6] sm:$0xff]
      %v442 = vld [vmem:[%s6 + $0x8] sm:$0xff]
      %v443 = vld [vmem:[%s6 + $0x10] sm:$0xff]
      %v444 = vld [vmem:[%s6 + $0x18] sm:$0xff]
      %v445 = vld [vmem:[%s7] sm:$0xff]
      %v446 = vld [vmem:[%s7 + $0x8] sm:$0xff]
      %v447 = vld [vmem:[%s7 + $0x10] sm:$0xff]
      %v448 = vld [vmem:[%s7 + $0x18] sm:$0xff]
      %v449 = vld [vmem:[#allocation2] sm:$0x1]
      %451 = vset.pattern.permute.xlu0 0
      %452 = vperm.xlu0 %451, %v428
      %v453 = vpop.permute.xlu0 %452
      %456 = vset.pattern.permute.xlu0 0
      %457 = vperm.xlu0 %456, %v429
      %v458 = vpop.permute.xlu0 %457
      %461 = vset.pattern.permute.xlu0 0
      %462 = vperm.xlu0 %461, %v430
      %v463 = vpop.permute.xlu0 %462
      %466 = vset.pattern.permute.xlu0 0
      %467 = vperm.xlu0 %466, %v431
      %v468 = vpop.permute.xlu0 %467
      %471 = vset.pattern.permute.xlu0 0
      %472 = vperm.xlu0 %471, %v424
      %v473 = vpop.permute.xlu0 %472
      %476 = vset.pattern.permute.xlu0 0
      %477 = vperm.xlu0 %476, %v425
      %v478 = vpop.permute.xlu0 %477
      %481 = vset.pattern.permute.xlu0 0
      %482 = vperm.xlu0 %481, %v426
      %v483 = vpop.permute.xlu0 %482
      %486 = vset.pattern.permute.xlu0 0
      %487 = vperm.xlu0 %486, %v427
      %v488 = vpop.permute.xlu0 %487
      %v491 = vlaneseq
      %v492 = vshrl.u32 %v491, 7
      %v493 = vsub.s32 0, %v492
      %v494 = vrot.slane %v423, %v493
      %v495 = vlaneseq
      %v496 = vshrl.u32 %v495, 7
      %v497 = vsub.s32 4, %v496
      %v498 = vrot.slane %v423, %v497
      %v501 = vlaneseq
      %v502 = vshrl.u32 %v501, 7
      %v503 = vsub.s32 0, %v502
      %v504 = vrot.slane %v494, %v503
      %v505 = vlaneseq
      %v506 = vshrl.u32 %v505, 7
      %v507 = vsub.s32 0, %v506
      %v508 = vrot.slane %v498, %v507
      %v509 = vmul.f32 %v473, %v504
      %v510 = vmul.f32 %v473, %v508
      %v511 = vmul.f32 %v478, %v504
      %v512 = vmul.f32 %v478, %v508
      %v513 = vmul.f32 %v483, %v504
      %v514 = vmul.f32 %v483, %v508
      %v515 = vmul.f32 %v488, %v504
      %v516 = vmul.f32 %v488, %v508
      %v517 = vadd.f32 %v453, %v509
      %v518 = vadd.f32 %v453, %v510
      %v519 = vadd.f32 %v458, %v511
      %v520 = vadd.f32 %v458, %v512
      %v521 = vadd.f32 %v463, %v513
      %v522 = vadd.f32 %v463, %v514
      %v523 = vadd.f32 %v468, %v515
      %v524 = vadd.f32 %v468, %v516
      %525 = vset.pattern.permute.xlu0 1
      %526 = vperm.xlu0 %525, %v424
      %v527 = vpop.permute.xlu0 %526
      %529 = vset.pattern.permute.xlu0 1
      %530 = vperm.xlu0 %529, %v425
      %v531 = vpop.permute.xlu0 %530
      %533 = vset.pattern.permute.xlu0 1
      %534 = vperm.xlu0 %533, %v426
      %v535 = vpop.permute.xlu0 %534
      %537 = vset.pattern.permute.xlu0 1
      %538 = vperm.xlu0 %537, %v427
      %v539 = vpop.permute.xlu0 %538
      %v541 = vlaneseq
      %v542 = vshrl.u32 %v541, 7
      %v543 = vsub.s32 1, %v542
      %v544 = vrot.slane %v423, %v543
      %v545 = vlaneseq
      %v546 = vshrl.u32 %v545, 7
      %v547 = vsub.s32 5, %v546
      %v548 = vrot.slane %v423, %v547
      %v551 = vlaneseq
      %v552 = vshrl.u32 %v551, 7
      %v553 = vsub.s32 1, %v552
      %v554 = vrot.slane %v544, %v553
      %v555 = vlaneseq
      %v556 = vshrl.u32 %v555, 7
      %v557 = vsub.s32 1, %v556
      %v558 = vrot.slane %v548, %v557
      %v559 = vmul.f32 %v527, %v554
      %v560 = vmul.f32 %v527, %v558
      %v561 = vmul.f32 %v531, %v554
      %v562 = vmul.f32 %v531, %v558
      %v563 = vmul.f32 %v535, %v554
      %v564 = vmul.f32 %v535, %v558
      %v565 = vmul.f32 %v539, %v554
      %v566 = vmul.f32 %v539, %v558
      %v567 = vadd.f32 %v517, %v559
      %v568 = vadd.f32 %v518, %v560
      %v569 = vadd.f32 %v519, %v561
      %v570 = vadd.f32 %v520, %v562
      %v571 = vadd.f32 %v521, %v563
      %v572 = vadd.f32 %v522, %v564
      %v573 = vadd.f32 %v523, %v565
      %v574 = vadd.f32 %v524, %v566
      %575 = vset.pattern.permute.xlu0 2
      %576 = vperm.xlu0 %575, %v424
      %v577 = vpop.permute.xlu0 %576
      %579 = vset.pattern.permute.xlu0 2
      %580 = vperm.xlu0 %579, %v425
      %v581 = vpop.permute.xlu0 %580
      %583 = vset.pattern.permute.xlu0 2
      %584 = vperm.xlu0 %583, %v426
      %v585 = vpop.permute.xlu0 %584
      %587 = vset.pattern.permute.xlu0 2
      %588 = vperm.xlu0 %587, %v427
      %v589 = vpop.permute.xlu0 %588
      %v591 = vlaneseq
      %v592 = vshrl.u32 %v591, 7
      %v593 = vsub.s32 2, %v592
      %v594 = vrot.slane %v423, %v593
      %v595 = vlaneseq
      %v596 = vshrl.u32 %v595, 7
      %v597 = vsub.s32 6, %v596
      %v598 = vrot.slane %v423, %v597
      %v601 = vlaneseq
      %v602 = vshrl.u32 %v601, 7
      %v603 = vsub.s32 2, %v602
      %v604 = vrot.slane %v594, %v603
      %v605 = vlaneseq
      %v606 = vshrl.u32 %v605, 7
      %v607 = vsub.s32 2, %v606
      %v608 = vrot.slane %v598, %v607
      %v609 = vmul.f32 %v577, %v604
      %v610 = vmul.f32 %v577, %v608
      %v611 = vmul.f32 %v581, %v604
      %v612 = vmul.f32 %v581, %v608
      %v613 = vmul.f32 %v585, %v604
      %v614 = vmul.f32 %v585, %v608
      %v615 = vmul.f32 %v589, %v604
      %v616 = vmul.f32 %v589, %v608
      %v617 = vadd.f32 %v567, %v609
      %v618 = vadd.f32 %v568, %v610
      %v619 = vadd.f32 %v569, %v611
      %v620 = vadd.f32 %v570, %v612
      %v621 = vadd.f32 %v571, %v613
      %v622 = vadd.f32 %v572, %v614
      %v623 = vadd.f32 %v573, %v615
      %v624 = vadd.f32 %v574, %v616
      %v625 = vmax.f32 %v617, 0.0
      %v626 = vmax.f32 %v618, 0.0
      %v627 = vmax.f32 %v619, 0.0
      %v628 = vmax.f32 %v620, 0.0
      %v629 = vmax.f32 %v621, 0.0
      %v630 = vmax.f32 %v622, 0.0
      %v631 = vmax.f32 %v623, 0.0
      %v632 = vmax.f32 %v624, 0.0
      %634 = vset.pattern.permute.xlu0 0
      %635 = vperm.xlu0 %634, %v432
      %v636 = vpop.permute.xlu0 %635
      %639 = vset.pattern.permute.xlu0 0
      %640 = vperm.xlu0 %639, %v433
      %v641 = vpop.permute.xlu0 %640
      %644 = vset.pattern.permute.xlu0 0
      %645 = vperm.xlu0 %644, %v434
      %v646 = vpop.permute.xlu0 %645
      %649 = vset.pattern.permute.xlu0 0
      %650 = vperm.xlu0 %649, %v435
      %v651 = vpop.permute.xlu0 %650
      %v653 = vmul.f32 %v636, %v625
      %v654 = vmul.f32 %v636, %v626
      %v655 = vmul.f32 %v641, %v627
      %v656 = vmul.f32 %v641, %v628
      %v657 = vmul.f32 %v646, %v629
      %v658 = vmul.f32 %v646, %v630
      %v659 = vmul.f32 %v651, %v631
      %v660 = vmul.f32 %v651, %v632
      %v661 = vadd.f32 %v653, %v655
      %v662 = vadd.f32 %v661, %v657
      %v663 = vadd.f32 %v662, %v659
      %v664 = vrot.slane %v663, 4
      %v665 = vadd.f32 %v663, %v664
      %v666 = vrot.slane %v665, 2
      %v667 = vadd.f32 %v665, %v666
      %v668 = vrot.slane %v667, 1
      %v669 = vadd.f32 %v667, %v668
      %v670 = vadd.f32 %v654, %v656
      %v671 = vadd.f32 %v670, %v658
      %v672 = vadd.f32 %v671, %v660
      %v673 = vrot.slane %v672, 4
      %v674 = vadd.f32 %v672, %v673
      %v675 = vrot.slane %v674, 2
      %v676 = vadd.f32 %v674, %v675
      %v677 = vrot.slane %v676, 1
      %v678 = vadd.f32 %v676, %v677
      %680 = vset.pattern.permute.xlu0 0
      %681 = vperm.xlu0 %680, %v436
      %v682 = vpop.permute.xlu0 %681
      %v684 = vadd.f32 %v669, %v682
      %v685 = vadd.f32 %v678, %v682
      %686 = vset.pattern.permute.xlu0 1
      %687 = vperm.xlu0 %686, %v432
      %v688 = vpop.permute.xlu0 %687
      %690 = vset.pattern.permute.xlu0 1
      %691 = vperm.xlu0 %690, %v433
      %v692 = vpop.permute.xlu0 %691
      %694 = vset.pattern.permute.xlu0 1
      %695 = vperm.xlu0 %694, %v434
      %v696 = vpop.permute.xlu0 %695
      %698 = vset.pattern.permute.xlu0 1
      %699 = vperm.xlu0 %698, %v435
      %v700 = vpop.permute.xlu0 %699
      %v702 = vmul.f32 %v688, %v625
      %v703 = vmul.f32 %v688, %v626
      %v704 = vmul.f32 %v692, %v627
      %v705 = vmul.f32 %v692, %v628
      %v706 = vmul.f32 %v696, %v629
      %v707 = vmul.f32 %v696, %v630
      %v708 = vmul.f32 %v700, %v631
      %v709 = vmul.f32 %v700, %v632
      %v710 = vadd.f32 %v702, %v704
      %v711 = vadd.f32 %v710, %v706
      %v712 = vadd.f32 %v711, %v708
      %v713 = vrot.slane %v712, 4
      %v714 = vadd.f32 %v712, %v713
      %v715 = vrot.slane %v714, 2
      %v716 = vadd.f32 %v714, %v715
      %v717 = vrot.slane %v716, 1
      %v718 = vadd.f32 %v716, %v717
      %v719 = vadd.f32 %v703, %v705
      %v720 = vadd.f32 %v719, %v707
      %v721 = vadd.f32 %v720, %v709
      %v722 = vrot.slane %v721, 4
      %v723 = vadd.f32 %v721, %v722
      %v724 = vrot.slane %v723, 2
      %v725 = vadd.f32 %v723, %v724
      %v726 = vrot.slane %v725, 1
      %v727 = vadd.f32 %v725, %v726
      %v728 = vadd.f32 %v718, %v682
      %v729 = vadd.f32 %v727, %v682
      %730 = vset.pattern.permute.xlu0 2
      %731 = vperm.xlu0 %730, %v432
      %v732 = vpop.permute.xlu0 %731
      %734 = vset.pattern.permute.xlu0 2
      %735 = vperm.xlu0 %734, %v433
      %v736 = vpop.permute.xlu0 %735
      %738 = vset.pattern.permute.xlu0 2
      %739 = vperm.xlu0 %738, %v434
      %v740 = vpop.permute.xlu0 %739
      %742 = vset.pattern.permute.xlu0 2
      %743 = vperm.xlu0 %742, %v435
      %v744 = vpop.permute.xlu0 %743
      %v746 = vmul.f32 %v732, %v625
      %v747 = vmul.f32 %v732, %v626
      %v748 = vmul.f32 %v736, %v627
      %v749 = vmul.f32 %v736, %v628
      %v750 = vmul.f32 %v740, %v629
      %v751 = vmul.f32 %v740, %v630
      %v752 = vmul.f32 %v744, %v631
      %v753 = vmul.f32 %v744, %v632
      %v754 = vadd.f32 %v746, %v748
      %v755 = vadd.f32 %v754, %v750
      %v756 = vadd.f32 %v755, %v752
      %v757 = vrot.slane %v756, 4
      %v758 = vadd.f32 %v756, %v757
      %v759 = vrot.slane %v758, 2
      %v760 = vadd.f32 %v758, %v759
      %v761 = vrot.slane %v760, 1
      %v762 = vadd.f32 %v760, %v761
      %v763 = vadd.f32 %v747, %v749
      %v764 = vadd.f32 %v763, %v751
      %v765 = vadd.f32 %v764, %v753
      %v766 = vrot.slane %v765, 4
      %v767 = vadd.f32 %v765, %v766
      %v768 = vrot.slane %v767, 2
      %v769 = vadd.f32 %v767, %v768
      %v770 = vrot.slane %v769, 1
      %v771 = vadd.f32 %v769, %v770
      %v772 = vadd.f32 %v762, %v682
      %v773 = vadd.f32 %v771, %v682
      %vm774 = vcmask 1040384
      %v775 = vsel %vm774, %v684, %v728
      %v776 = vsel %vm774, %v685, %v729
      %vm777 = vcmask 1041408
      %v778 = vsel %vm777, %v775, %v772
      %v779 = vsel %vm777, %v776, %v773
      %v782 = vcombine.low %v778, %v779
      %784 = vst [vmem:[%s412] sm:$0x77] %v782
      %v787 = vrot.slane %v728, 1
      %v788 = vrot.slane %v729, 1
      %v791 = vmax.f32 %v684, %v787
      %v792 = vmax.f32 %v685, %v788
      %v795 = vrot.slane %v772, 2
      %v796 = vrot.slane %v773, 2
      %v799 = vmax.f32 %v791, %v795
      %v800 = vmax.f32 %v792, %v796
      %v801 = vsub.f32 %v684, %v799
      %v802 = vsub.f32 %v685, %v800
      %v803 = vmul.f32 %v801, 1.442695
      %v804 = vpow.pop %v803
      %v805 = vmul.f32 %v802, 1.442695
      %v806 = vpow.pop %v805
      %v809 = vrot.slane %v799, 7
      %v810 = vrot.slane %v800, 7
      %v813 = vsub.f32 %v728, %v809
      %v814 = vsub.f32 %v729, %v810
      %v815 = vmul.f32 %v813, 1.442695
      %v816 = vpow.pop %v815
      %v817 = vmul.f32 %v814, 1.442695
      %v818 = vpow.pop %v817
      %v819 = vrot.slane %v799, 6
      %v820 = vrot.slane %v800, 6
      %v823 = vsub.f32 %v772, %v819
      %v824 = vsub.f32 %v773, %v820
      %v825 = vmul.f32 %v823, 1.442695
      %v826 = vpow.pop %v825
      %v827 = vmul.f32 %v824, 1.442695
      %v828 = vpow.pop %v827
      %v831 = vrot.slane %v816, 1
      %v832 = vrot.slane %v818, 1
      %v835 = vadd.f32 %v804, %v831
      %v836 = vadd.f32 %v806, %v832
      %v839 = vrot.slane %v826, 2
      %v840 = vrot.slane %v828, 2
      %v843 = vadd.f32 %v835, %v839
      %v844 = vadd.f32 %v836, %v840
      %v845 = vrcp.pop %v843
      %v846 = vrcp.pop %v844
      %v847 = vmul.f32 %v804, %v845
      %v848 = vmul.f32 %v806, %v846
      %v851 = vrot.slane %v845, 7
      %v852 = vrot.slane %v846, 7
      %v855 = vmul.f32 %v816, %v851
      %v856 = vmul.f32 %v818, %v852
      %v857 = vrot.slane %v845, 6
      %v858 = vrot.slane %v846, 6
      %v861 = vmul.f32 %v826, %v857
      %v862 = vmul.f32 %v828, %v858
      %864 = vset.pattern.permute.xlu0 0
      %865 = vperm.xlu0 %864, %v441
      %v866 = vpop.permute.xlu0 %865
      %869 = vset.pattern.permute.xlu0 0
      %870 = vperm.xlu0 %869, %v442
      %v871 = vpop.permute.xlu0 %870
      %874 = vset.pattern.permute.xlu0 0
      %875 = vperm.xlu0 %874, %v443
      %v876 = vpop.permute.xlu0 %875
      %879 = vset.pattern.permute.xlu0 0
      %880 = vperm.xlu0 %879, %v444
      %v881 = vpop.permute.xlu0 %880
      %884 = vset.pattern.permute.xlu0 0
      %885 = vperm.xlu0 %884, %v437
      %v886 = vpop.permute.xlu0 %885
      %889 = vset.pattern.permute.xlu0 0
      %890 = vperm.xlu0 %889, %v438
      %v891 = vpop.permute.xlu0 %890
      %894 = vset.pattern.permute.xlu0 0
      %895 = vperm.xlu0 %894, %v439
      %v896 = vpop.permute.xlu0 %895
      %899 = vset.pattern.permute.xlu0 0
      %900 = vperm.xlu0 %899, %v440
      %v901 = vpop.permute.xlu0 %900
      %v903 = vmul.f32 %v886, %v504
      %v904 = vmul.f32 %v886, %v508
      %v905 = vmul.f32 %v891, %v504
      %v906 = vmul.f32 %v891, %v508
      %v907 = vmul.f32 %v896, %v504
      %v908 = vmul.f32 %v896, %v508
      %v909 = vmul.f32 %v901, %v504
      %v910 = vmul.f32 %v901, %v508
      %v911 = vadd.f32 %v866, %v903
      %v912 = vadd.f32 %v866, %v904
      %v913 = vadd.f32 %v871, %v905
      %v914 = vadd.f32 %v871, %v906
      %v915 = vadd.f32 %v876, %v907
      %v916 = vadd.f32 %v876, %v908
      %v917 = vadd.f32 %v881, %v909
      %v918 = vadd.f32 %v881, %v910
      %919 = vset.pattern.permute.xlu0 1
      %920 = vperm.xlu0 %919, %v437
      %v921 = vpop.permute.xlu0 %920
      %923 = vset.pattern.permute.xlu0 1
      %924 = vperm.xlu0 %923, %v438
      %v925 = vpop.permute.xlu0 %924
      %927 = vset.pattern.permute.xlu0 1
      %928 = vperm.xlu0 %927, %v439
      %v929 = vpop.permute.xlu0 %928
      %931 = vset.pattern.permute.xlu0 1
      %932 = vperm.xlu0 %931, %v440
      %v933 = vpop.permute.xlu0 %932
      %v935 = vmul.f32 %v921, %v554
      %v936 = vmul.f32 %v921, %v558
      %v937 = vmul.f32 %v925, %v554
      %v938 = vmul.f32 %v925, %v558
      %v939 = vmul.f32 %v929, %v554
      %v940 = vmul.f32 %v929, %v558
      %v941 = vmul.f32 %v933, %v554
      %v942 = vmul.f32 %v933, %v558
      %v943 = vadd.f32 %v911, %v935
      %v944 = vadd.f32 %v912, %v936
      %v945 = vadd.f32 %v913, %v937
      %v946 = vadd.f32 %v914, %v938
      %v947 = vadd.f32 %v915, %v939
      %v948 = vadd.f32 %v916, %v940
      %v949 = vadd.f32 %v917, %v941
      %v950 = vadd.f32 %v918, %v942
      %951 = vset.pattern.permute.xlu0 2
      %952 = vperm.xlu0 %951, %v437
      %v953 = vpop.permute.xlu0 %952
      %955 = vset.pattern.permute.xlu0 2
      %956 = vperm.xlu0 %955, %v438
      %v957 = vpop.permute.xlu0 %956
      %959 = vset.pattern.permute.xlu0 2
      %960 = vperm.xlu0 %959, %v439
      %v961 = vpop.permute.xlu0 %960
      %963 = vset.pattern.permute.xlu0 2
      %964 = vperm.xlu0 %963, %v440
      %v965 = vpop.permute.xlu0 %964
      %v967 = vmul.f32 %v953, %v604
      %v968 = vmul.f32 %v953, %v608
      %v969 = vmul.f32 %v957, %v604
      %v970 = vmul.f32 %v957, %v608
      %v971 = vmul.f32 %v961, %v604
      %v972 = vmul.f32 %v961, %v608
      %v973 = vmul.f32 %v965, %v604
      %v974 = vmul.f32 %v965, %v608
      %v975 = vadd.f32 %v943, %v967
      %v976 = vadd.f32 %v944, %v968
      %v977 = vadd.f32 %v945, %v969
      %v978 = vadd.f32 %v946, %v970
      %v979 = vadd.f32 %v947, %v971
      %v980 = vadd.f32 %v948, %v972
      %v981 = vadd.f32 %v949, %v973
      %v982 = vadd.f32 %v950, %v974
      %983 = vset.pattern.permute.xlu0 3
      %984 = vperm.xlu0 %983, %v437
      %v985 = vpop.permute.xlu0 %984
      %987 = vset.pattern.permute.xlu0 3
      %988 = vperm.xlu0 %987, %v438
      %v989 = vpop.permute.xlu0 %988
      %991 = vset.pattern.permute.xlu0 3
      %992 = vperm.xlu0 %991, %v439
      %v993 = vpop.permute.xlu0 %992
      %995 = vset.pattern.permute.xlu0 3
      %996 = vperm.xlu0 %995, %v440
      %v997 = vpop.permute.xlu0 %996
      %v999 = vlaneseq
      %v1000 = vshrl.u32 %v999, 7
      %v1001 = vsub.s32 0, %v1000
      %v1002 = vrot.slane %v847, %v1001
      %v1003 = vlaneseq
      %v1004 = vshrl.u32 %v1003, 7
      %v1005 = vsub.s32 0, %v1004
      %v1006 = vrot.slane %v848, %v1005
      %v1007 = vmul.f32 %v985, %v1002
      %v1008 = vmul.f32 %v985, %v1006
      %v1009 = vmul.f32 %v989, %v1002
      %v1010 = vmul.f32 %v989, %v1006
      %v1011 = vmul.f32 %v993, %v1002
      %v1012 = vmul.f32 %v993, %v1006
      %v1013 = vmul.f32 %v997, %v1002
      %v1014 = vmul.f32 %v997, %v1006
      %v1015 = vadd.f32 %v975, %v1007
      %v1016 = vadd.f32 %v976, %v1008
      %v1017 = vadd.f32 %v977, %v1009
      %v1018 = vadd.f32 %v978, %v1010
      %v1019 = vadd.f32 %v979, %v1011
      %v1020 = vadd.f32 %v980, %v1012
      %v1021 = vadd.f32 %v981, %v1013
      %v1022 = vadd.f32 %v982, %v1014
      %1023 = vset.pattern.permute.xlu0 4
      %1024 = vperm.xlu0 %1023, %v437
      %v1025 = vpop.permute.xlu0 %1024
      %1027 = vset.pattern.permute.xlu0 4
      %1028 = vperm.xlu0 %1027, %v438
      %v1029 = vpop.permute.xlu0 %1028
      %1031 = vset.pattern.permute.xlu0 4
      %1032 = vperm.xlu0 %1031, %v439
      %v1033 = vpop.permute.xlu0 %1032
      %1035 = vset.pattern.permute.xlu0 4
      %1036 = vperm.xlu0 %1035, %v440
      %v1037 = vpop.permute.xlu0 %1036
      %v1039 = vlaneseq
      %v1040 = vshrl.u32 %v1039, 7
      %v1041 = vsub.s32 1, %v1040
      %v1042 = vrot.slane %v855, %v1041
      %v1043 = vlaneseq
      %v1044 = vshrl.u32 %v1043, 7
      %v1045 = vsub.s32 1, %v1044
      %v1046 = vrot.slane %v856, %v1045
      %v1047 = vmul.f32 %v1025, %v1042
      %v1048 = vmul.f32 %v1025, %v1046
      %v1049 = vmul.f32 %v1029, %v1042
      %v1050 = vmul.f32 %v1029, %v1046
      %v1051 = vmul.f32 %v1033, %v1042
      %v1052 = vmul.f32 %v1033, %v1046
      %v1053 = vmul.f32 %v1037, %v1042
      %v1054 = vmul.f32 %v1037, %v1046
      %v1055 = vadd.f32 %v1015, %v1047
      %v1056 = vadd.f32 %v1016, %v1048
      %v1057 = vadd.f32 %v1017, %v1049
      %v1058 = vadd.f32 %v1018, %v1050
      %v1059 = vadd.f32 %v1019, %v1051
      %v1060 = vadd.f32 %v1020, %v1052
      %v1061 = vadd.f32 %v1021, %v1053
      %v1062 = vadd.f32 %v1022, %v1054
      %1063 = vset.pattern.permute.xlu0 5
      %1064 = vperm.xlu0 %1063, %v437
      %v1065 = vpop.permute.xlu0 %1064
      %1067 = vset.pattern.permute.xlu0 5
      %1068 = vperm.xlu0 %1067, %v438
      %v1069 = vpop.permute.xlu0 %1068
      %1071 = vset.pattern.permute.xlu0 5
      %1072 = vperm.xlu0 %1071, %v439
      %v1073 = vpop.permute.xlu0 %1072
      %1075 = vset.pattern.permute.xlu0 5
      %1076 = vperm.xlu0 %1075, %v440
      %v1077 = vpop.permute.xlu0 %1076
      %v1079 = vlaneseq
      %v1080 = vshrl.u32 %v1079, 7
      %v1081 = vsub.s32 2, %v1080
      %v1082 = vrot.slane %v861, %v1081
      %v1083 = vlaneseq
      %v1084 = vshrl.u32 %v1083, 7
      %v1085 = vsub.s32 2, %v1084
      %v1086 = vrot.slane %v862, %v1085
      %v1087 = vmul.f32 %v1065, %v1082
      %v1088 = vmul.f32 %v1065, %v1086
      %v1089 = vmul.f32 %v1069, %v1082
      %v1090 = vmul.f32 %v1069, %v1086
      %v1091 = vmul.f32 %v1073, %v1082
      %v1092 = vmul.f32 %v1073, %v1086
      %v1093 = vmul.f32 %v1077, %v1082
      %v1094 = vmul.f32 %v1077, %v1086
      %v1095 = vadd.f32 %v1055, %v1087
      %v1096 = vadd.f32 %v1056, %v1088
      %v1097 = vadd.f32 %v1057, %v1089
      %v1098 = vadd.f32 %v1058, %v1090
      %v1099 = vadd.f32 %v1059, %v1091
      %v1100 = vadd.f32 %v1060, %v1092
      %v1101 = vadd.f32 %v1061, %v1093
      %v1102 = vadd.f32 %v1062, %v1094
      %v1103 = vmax.f32 %v1095, 0.0
      %v1104 = vmax.f32 %v1096, 0.0
      %v1105 = vmax.f32 %v1097, 0.0
      %v1106 = vmax.f32 %v1098, 0.0
      %v1107 = vmax.f32 %v1099, 0.0
      %v1108 = vmax.f32 %v1100, 0.0
      %v1109 = vmax.f32 %v1101, 0.0
      %v1110 = vmax.f32 %v1102, 0.0
      %1112 = vset.pattern.permute.xlu0 0
      %1113 = vperm.xlu0 %1112, %v445
      %v1114 = vpop.permute.xlu0 %1113
      %1117 = vset.pattern.permute.xlu0 0
      %1118 = vperm.xlu0 %1117, %v446
      %v1119 = vpop.permute.xlu0 %1118
      %1122 = vset.pattern.permute.xlu0 0
      %1123 = vperm.xlu0 %1122, %v447
      %v1124 = vpop.permute.xlu0 %1123
      %1127 = vset.pattern.permute.xlu0 0
      %1128 = vperm.xlu0 %1127, %v448
      %v1129 = vpop.permute.xlu0 %1128
      %v1131 = vmul.f32 %v1114, %v1103
      %v1132 = vmul.f32 %v1114, %v1104
      %v1133 = vmul.f32 %v1119, %v1105
      %v1134 = vmul.f32 %v1119, %v1106
      %v1135 = vmul.f32 %v1124, %v1107
      %v1136 = vmul.f32 %v1124, %v1108
      %v1137 = vmul.f32 %v1129, %v1109
      %v1138 = vmul.f32 %v1129, %v1110
      %v1139 = vadd.f32 %v1131, %v1133
      %v1140 = vadd.f32 %v1139, %v1135
      %v1141 = vadd.f32 %v1140, %v1137
      %v1142 = vrot.slane %v1141, 4
      %v1143 = vadd.f32 %v1141, %v1142
      %v1144 = vrot.slane %v1143, 2
      %v1145 = vadd.f32 %v1143, %v1144
      %v1146 = vrot.slane %v1145, 1
      %v1147 = vadd.f32 %v1145, %v1146
      %v1148 = vadd.f32 %v1132, %v1134
      %v1149 = vadd.f32 %v1148, %v1136
      %v1150 = vadd.f32 %v1149, %v1138
      %v1151 = vrot.slane %v1150, 4
      %v1152 = vadd.f32 %v1150, %v1151
      %v1153 = vrot.slane %v1152, 2
      %v1154 = vadd.f32 %v1152, %v1153
      %v1155 = vrot.slane %v1154, 1
      %v1156 = vadd.f32 %v1154, %v1155
      %1158 = vset.pattern.permute.xlu0 0
      %1159 = vperm.xlu0 %1158, %v449
      %v1160 = vpop.permute.xlu0 %1159
      %v1162 = vlaneseq
      %v1163 = vshrl.u32 %v1162, 7
      %v1164 = vsub.s32 0, %v1163
      %v1165 = vrot.slane %v1160, %v1164
      %v1166 = vadd.f32 %v1147, %v1165
      %v1167 = vadd.f32 %v1156, %v1165
      %v1168 = vmul.f32 %v861, %v1166
      %v1169 = vmul.f32 %v862, %v1167
      %v1172 = vrot.slane %v1168, 1
      %v1173 = vrot.slane %v1169, 1
      %v1176 = vadd.f32 %v855, %v1172
      %v1177 = vadd.f32 %v856, %v1173
      %v1180 = vcombine.low %v1176, %v1177
      %v1182 = vunpack.c.l.s4 1966171168
      %v1183 = vunpack.c.0.s8 %v1182
      %v1184 = vlaneseq
      %v1185 = vshrl.u32 %v1184, 7
      %v1186 = vsub.s32 %v1183, %v1185
      %v1187 = vrot.slane %v1180, %v1186
      %v1188 = vcombine.high %v1187, %v1187
      %v1190 = vunpack.c.l.s4 1966171168
      %v1191 = vunpack.c.0.s8 %v1190
      %v1192 = vlaneseq
      %v1193 = vshrl.u32 %v1192, 7
      %v1194 = vsub.s32 %v1191, %v1193
      %v1195 = vrot.slane %v1188, %v1194
      %v1197 = vlaneseq
      %vm1198 = vcmp.ge.s32.totalorder %v1197, 0
      %vm1199 = vcmp.lt.s32.totalorder %v1197, 256
      %vm1200 = vmand %vm1198, %vm1199
      %1201 = vst.msk [vmem:[%s421] sm:$0x3] %vm1200, %v1195
      %s1202 = smul.u32 2, %s29
      %p1203 = scmp.lt.s32.totalorder %s28, 1
      %s1204 = scalar_select %p1203, %s28, 1
      %p1205 = scmp.lt.s32.totalorder %s1202, 1
      %s1206 = scalar_select %p1205, %s1202, 1
      %s1207 = smul.addr %s1204, 2
      %s1208 = sadd.s32 %s1206, %s1207
      %s1209 = smul.addr %s1208, 4
      %s1210 = scalar_lea.vmem %s9, %s1209
      %s1211 = smul.u32 2, %s29
      %p1212 = scmp.lt.s32.totalorder %s28, 1
      %s1213 = scalar_select %p1212, %s28, 1
      %p1214 = scmp.lt.s32.totalorder %s1211, 1
      %s1215 = scalar_select %p1214, %s1211, 1
      %s1216 = smul.addr %s1213, 2
      %s1217 = sadd.s32 %s1215, %s1216
      %s1218 = scalar_lea.vmem %s10, %s1217
      // Predicated region
      $region57: #{shm_net_forward.1} parent=55 // pred_check
        %p1219 = pneg %p252
      $region58: #{shm_net_forward.1} parent=55 // pred_check_branch
        %1221 = sbr.rel (%p1219) target = $region60
      $region59: #{shm_net_forward.1} parent=55 // pred_region
        %s1222 = smul.u32 2, %s29
      $region60: #{shm_net_forward.1} parent=55 // pred_fallthru
        _
      // Predicated region
      $region61: #{shm_net_forward.1} parent=55 // pred_check
        %p1223 = pneg %p280
      $region62: #{shm_net_forward.1} parent=55 // pred_check_branch
        %1225 = sbr.rel (%p1223) target = $region64
      $region63: #{shm_net_forward.1} parent=55 // pred_region
        %s1226 = smul.u32 2, %s29
      $region64: #{shm_net_forward.1} parent=55 // pred_fallthru
        _
    $region56: #{shm_net_forward.1} parent=5 // pred_fallthru
      _
    %p1227 = scmp.le.s32.totalorder 2, %s19
    // Predicated region
    $region65: #{shm_net_forward.1} parent=5 // pred_check
      %p1228 = pneg %p1227
    $region66: #{shm_net_forward.1} parent=5 // pred_check_branch
      %1230 = sbr.rel (%p1228) target = $region68
    $region67: #{shm_net_forward.1} parent=5 // pred_region
      %s1231 = ssub.s32 %s19, 2
      // Predicated region
      $region69: #{shm_net_forward.1} parent=67 // pred_check
        %p1232 = pneg %p258
      $region70: #{shm_net_forward.1} parent=67 // pred_check_branch
        %1234 = sbr.rel (%p1232) target = $region72
      $region71: #{shm_net_forward.1} parent=67 // pred_region
        %s1235 = smul.u32 2, %s31
        %p1236 = scmp.lt.s32.totalorder %s30, 1
        %s1237 = scalar_select %p1236, %s30, 1
        %p1238 = scmp.lt.s32.totalorder %s1235, 1
        %s1239 = scalar_select %p1238, %s1235, 1
        %s1240 = smul.addr %s1237, 2
        %s1241 = sadd.s32 %s1239, %s1240
        %s1242 = smul.addr %s1241, 4
        %s1243 = scalar_lea.vmem %s9, %s1242
      $region72: #{shm_net_forward.1} parent=67 // pred_fallthru
        _
      // Predicated region
      $region73: #{shm_net_forward.1} parent=67 // pred_check
        %p1244 = pneg %p286
      $region74: #{shm_net_forward.1} parent=67 // pred_check_branch
        %1246 = sbr.rel (%p1244) target = $region76
      $region75: #{shm_net_forward.1} parent=67 // pred_region
        %s1247 = smul.u32 2, %s31
        %p1248 = scmp.lt.s32.totalorder %s30, 1
        %s1249 = scalar_select %p1248, %s30, 1
        %p1250 = scmp.lt.s32.totalorder %s1247, 1
        %s1251 = scalar_select %p1250, %s1247, 1
        %s1252 = smul.addr %s1249, 2
        %s1253 = sadd.s32 %s1251, %s1252
        %s1254 = scalar_lea.vmem %s10, %s1253
      $region76: #{shm_net_forward.1} parent=67 // pred_fallthru
        _
    $region68: #{shm_net_forward.1} parent=5 // pred_fallthru
      _
  $region6: #{shm_net_forward.1} parent=0 // loop_footer
    %s23 = sadd.s32 1, %s19
  $region7: #{shm_net_forward.1} parent=0 // loop_footer_branch
    %18 = sbr.rel target = $region3
  $region8: #{shm_net_forward.1} parent=0 // loop_exit
    _

</llo_original>
